<compile_context>
chip_gen: v6e
topology: v6e:2x2x1
jax: 0.10.0
libtpu: 0.0.40
codegen_flags: <defaults>
</compile_context>

<pallas_src>
import functools

import jax
import jax.numpy as jnp
from jax.experimental import pallas as pl
from jax.experimental.pallas import tpu as pltpu


# --------------------------------------------------------------------------
# Kernels
# --------------------------------------------------------------------------
def _fused_whole_kernel(x_ref, w_ref, b_ref, o_ref):
    """Whole problem resident in VMEM (no grid): one dot + bias + ReLU."""
    out = jnp.dot(x_ref[...], w_ref[...], preferred_element_type=jnp.float32)
    o_ref[...] = jnp.maximum(out + b_ref[...], 0.0).astype(o_ref.dtype)


def _tile_kernel_single_k(x_ref, w_ref, b_ref, o_ref):
    """Tiled over (M, N) only: full-K slab per step, no accumulator."""
    out = jnp.dot(x_ref[...], w_ref[...], preferred_element_type=jnp.float32)
    o_ref[...] = jnp.maximum(out + b_ref[...], 0.0).astype(o_ref.dtype)


def _tile_kernel_multi_k(x_ref, w_ref, b_ref, o_ref):
    """Tiled over (M, N, K).  The f32 output tile doubles as the accumulator:
    its block index is constant over k, so it stays resident in VMEM."""
    k = pl.program_id(2)
    prod = jnp.dot(x_ref[...], w_ref[...], preferred_element_type=jnp.float32)

    @pl.when(k == 0)
    def _():
        o_ref[...] = prod

    @pl.when(k != 0)
    def _():
        o_ref[...] = o_ref[...] + prod

    @pl.when(k == pl.num_programs(2) - 1)
    def _():
        o_ref[...] = jnp.maximum(o_ref[...] + b_ref[...], 0.0)


def _round_up(x, m):
    return ((x + m - 1) // m) * m


# --------------------------------------------------------------------------
# Wrapper
# --------------------------------------------------------------------------
@functools.partial(
    jax.jit,
    static_argnames=("tm", "tn", "compute_dtype",
                     "small_vmem_bytes", "tile_budget_bytes"),
)
def linear_relu(x, w_t, b, *, tm=256, tn=256, compute_dtype=None,
                small_vmem_bytes=24 * 1024 * 1024,
                tile_budget_bytes=16 * 1024 * 1024):
    """y = relu(x @ w_t + b).

    x:   (M, K)  — activations
    w_t: (K, N)  — transposed PyTorch Linear weight
    b:   (N,)    — bias
    compute_dtype: optional low-precision MXU input dtype (e.g. jnp.bfloat16);
                   accumulation is always f32.
    """
    M, K = x.shape
    Kw, N = w_t.shape
    assert K == Kw, f"inner dims mismatch: {K} vs {Kw}"
    out_dtype = x.dtype

    # Optional bf16 (etc.) MXU inputs for v6e/v7x throughput; f32 accumulate.
    if compute_dtype is not None:
        cd = jnp.dtype(compute_dtype)
        x = x.astype(cd)
        w_t = w_t.astype(cd)
    b2 = b.astype(jnp.float32).reshape(1, N)

    in_isz = x.dtype.itemsize
    footprint = in_isz * (M * K + K * N) + 4 * (N + M * N)

    # ------------------------------------------------------------------
    # Small path: whole problem fits comfortably in VMEM — no grid, no
    # pipeline prologue/epilogue, a single fused dot + bias + ReLU.
    # ------------------------------------------------------------------
    if footprint <= small_vmem_bytes:
        vmem_spec = pl.BlockSpec(memory_space=pltpu.MemorySpace.VMEM)
        return pl.pallas_call(
            _fused_whole_kernel,
            out_shape=jax.ShapeDtypeStruct((M, N), out_dtype),
            in_specs=[vmem_spec, vmem_spec, vmem_spec],
            out_specs=vmem_spec,
            compiler_params=pltpu.CompilerParams(
                vmem_limit_bytes=int(min(footprint + (16 << 20), 48 << 20))),
        )(x, w_t, b2)

    # ------------------------------------------------------------------
    # Tiled path: MXU-aligned (M, N) tiles; K is split only if the full-K
    # slab would blow the tile VMEM budget.
    # ------------------------------------------------------------------
    tm_eff = tm if M > tm else M          # full-dim block if it fits (no pad)
    tn_eff = tn if N > tn else N

    # v7x has 2 TensorCores: keep at least 2 tiles on the parallel grid.
    if (M <= tm_eff) and (N <= tn_eff):
        if tn_eff >= 256 and tn_eff % 256 == 0:
            tn_eff //= 2
        elif tm_eff >= 16 and tm_eff % 16 == 0:
            tm_eff //= 2

    Mp = M if M <= tm_eff else _round_up(M, tm_eff)
    Np = N if N <= tn_eff else _round_up(N, tn_eff)

    # Prefer nk == 1 (no reduction axis) whenever double-buffered x/w tiles
    # plus the output tile fit the budget (safe for v7x's 64 MiB VMEM).
    per_k = 2 * (tm_eff + tn_eff) * in_isz          # double-buffered x & w tiles
    fixed = 2 * tm_eff * tn_eff * 4 + 2 * tn_eff * 4  # output tile + bias tile
    k_cap = max(512, (tile_budget_bytes - fixed) // max(per_k, 1))

    if K <= k_cap:
        tk_eff, Kp, nk = K, K, 1
    else:
        tk_eff = max(512, (k_cap // 512) * 512)
        Kp = _round_up(K, tk_eff)
        nk = Kp // tk_eff

    # Pad only genuinely ragged dims (zero padding is mathematically inert:
    # zero rows/cols contribute nothing, relu(0 + 0) = 0, result is sliced).
    xp = x if (Mp == M and Kp == K) else jnp.pad(x, ((0, Mp - M), (0, Kp - K)))
    wp = w_t if (Kp == K and Np == N) else jnp.pad(w_t, ((0, Kp - K), (0, Np - N)))
    bp = b2 if Np == N else jnp.pad(b2, ((0, 0), (0, Np - N)))

    if nk == 1:
        out = pl.pallas_call(
            _tile_kernel_single_k,
            out_shape=jax.ShapeDtypeStruct((Mp, Np), jnp.float32),
            grid=(Mp // tm_eff, Np // tn_eff),
            in_specs=[
                pl.BlockSpec((tm_eff, Kp), lambda i, j: (i, 0)),
                pl.BlockSpec((Kp, tn_eff), lambda i, j: (0, j)),
                pl.BlockSpec((1, tn_eff), lambda i, j: (0, j)),
            ],
            out_specs=pl.BlockSpec((tm_eff, tn_eff), lambda i, j: (i, j)),
            compiler_params=pltpu.CompilerParams(
                dimension_semantics=("parallel", "parallel"),
                vmem_limit_bytes=40 << 20),
        )(xp, wp, bp)
    else:
        out = pl.pallas_call(
            _tile_kernel_multi_k,
            out_shape=jax.ShapeDtypeStruct((Mp, Np), jnp.float32),
            grid=(Mp // tm_eff, Np // tn_eff, nk),
            in_specs=[
                pl.BlockSpec((tm_eff, tk_eff), lambda i, j, k: (i, k)),
                pl.BlockSpec((tk_eff, tn_eff), lambda i, j, k: (k, j)),
                pl.BlockSpec((1, tn_eff), lambda i, j, k: (0, j)),
            ],
            out_specs=pl.BlockSpec((tm_eff, tn_eff), lambda i, j, k: (i, j)),
            compiler_params=pltpu.CompilerParams(
                dimension_semantics=("parallel", "parallel", "arbitrary"),
                vmem_limit_bytes=40 << 20),
        )(xp, wp, bp)

    if Mp != M or Np != N:
        out = out[:M, :N]
    return out.astype(out_dtype)


# --------------------------------------------------------------------------
# Demo / self-test
# --------------------------------------------------------------------------
if __name__ == "__main__":
    key = jax.random.PRNGKey(0)

    # ---- primary module shape: batch=8, in_dim=32, out_dim=128 (small path) ----
    batch, in_dim, out_dim = 8, 32, 128
    kx, kw, kb = jax.random.split(key, 3)
    x = jax.random.normal(kx, (batch, in_dim), dtype=jnp.float32)
    # PyTorch Linear weight shape is (out_dim, in_dim); we feed its transpose.
    w = jax.random.normal(kw, (out_dim, in_dim), dtype=jnp.float32) * (in_dim ** -0.5)
    b = jax.random.normal(kb, (out_dim,), dtype=jnp.float32) * 0.01
    w_t = w.T                                             # (in_dim, out_dim)

    out = linear_relu(x, w_t, b)
    jax.block_until_ready(out)
    ref = jnp.maximum(
        jnp.dot(x, w_t, precision=jax.lax.Precision.HIGHEST) + b[None, :], 0.0)
    assert out.shape == (batch, out_dim)
    assert jnp.allclose(out, ref, atol=1e-5, rtol=1e-5)

    # ---- mid-size shape: exercises the raised small-path threshold (one fused dot) ----
    M2, K2, N2 = 512, 1024, 1024
    k2x, k2w, k2b = jax.random.split(jax.random.PRNGKey(1), 3)
    x2 = jax.random.normal(k2x, (M2, K2), dtype=jnp.float32)
    w2_t = jax.random.normal(k2w, (K2, N2), dtype=jnp.float32) * (K2 ** -0.5)
    b2v = jax.random.normal(k2b, (N2,), dtype=jnp.float32) * 0.01
    out2 = linear_relu(x2, w2_t, b2v)
    jax.block_until_ready(out2)
    ref2 = jnp.maximum(
        jnp.dot(x2, w2_t, precision=jax.lax.Precision.HIGHEST) + b2v[None, :], 0.0)
    err2 = jnp.linalg.norm(out2 - ref2) / (jnp.linalg.norm(ref2) + 1e-12)
    assert out2.shape == (M2, N2)
    assert float(err2) < 2e-2, f"small/fused path rel_err={float(err2)}"

    # ---- force the tiled multi-K path (bf16 MXU inputs, f32 accumulation) ----
    M3, K3, N3 = 256, 2048, 512
    k3x, k3w, k3b = jax.random.split(jax.random.PRNGKey(2), 3)
    x3 = jax.random.normal(k3x, (M3, K3), dtype=jnp.float32)
    w3_t = jax.random.normal(k3w, (K3, N3), dtype=jnp.float32) * (K3 ** -0.5)
    b3v = jax.random.normal(k3b, (N3,), dtype=jnp.float32) * 0.01
    out3 = linear_relu(x3, w3_t, b3v, compute_dtype=jnp.bfloat16,
                       small_vmem_bytes=0, tile_budget_bytes=2 * 1024 * 1024)
    jax.block_until_ready(out3)
    ref3 = jnp.maximum(
        jnp.dot(x3, w3_t, precision=jax.lax.Precision.HIGHEST) + b3v[None, :], 0.0)
    err3 = jnp.linalg.norm(out3 - ref3) / (jnp.linalg.norm(ref3) + 1e-12)
    assert out3.shape == (M3, N3)
    assert float(err3) < 3e-2, f"tiled multi-K (bf16) rel_err={float(err3)}"

    print("KERNEL_OK")
</pallas_src>

<mosaic_0001>
module attributes {stable_mosaic.version = 11 : i64} {
  func.func @_fused_whole_kernel(%arg0: memref<8x32xf32, #tpu.memory_space<vmem>>, %arg1: memref<32x128xf32, #tpu.memory_space<vmem>>, %arg2: memref<1x128xf32, #tpu.memory_space<vmem>>, %arg3: memref<8x128xf32, #tpu.memory_space<vmem>>) attributes {dimension_semantics = [], scalar_prefetch = 0 : i64, scratch_operands = 0 : i64, tpu.core_type = #tpu.core_type<tc>} {
    %c0 = arith.constant 0 : index
    %c0_0 = arith.constant 0 : index
    %0 = vector.load %arg0[%c0, %c0_0] : memref<8x32xf32, #tpu.memory_space<vmem>>, vector<8x32xf32>
    %c0_1 = arith.constant 0 : index
    %c0_2 = arith.constant 0 : index
    %1 = vector.load %arg1[%c0_1, %c0_2] : memref<32x128xf32, #tpu.memory_space<vmem>>, vector<32x128xf32>
    %cst = arith.constant dense<0.000000e+00> : vector<8x128xf32>
    %2 = tpu.matmul %0, %1, %cst {dimension_numbers = #tpu.dot_dimension_numbers<[1], [0], [0], [1], [0, 0, 1, 1], [], []>} : vector<8x32xf32>, vector<32x128xf32>, vector<8x128xf32> -> vector<8x128xf32>
    %c0_3 = arith.constant 0 : index
    %c0_4 = arith.constant 0 : index
    %3 = vector.load %arg2[%c0_3, %c0_4] : memref<1x128xf32, #tpu.memory_space<vmem>>, vector<1x128xf32>
    %4 = vector.broadcast %3 : vector<1x128xf32> to vector<8x128xf32>
    %5 = arith.addf %2, %4 : vector<8x128xf32>
    %cst_5 = arith.constant 0.000000e+00 : f32
    %6 = vector.broadcast %cst_5 : f32 to vector<8x128xf32>
    %7 = arith.maximumf %5, %6 : vector<8x128xf32>
    %c0_6 = arith.constant 0 : index
    %c0_7 = arith.constant 0 : index
    %8 = vector.load %arg3[%c0_6, %c0_7] : memref<8x128xf32, #tpu.memory_space<vmem>>, vector<8x128xf32>
    tpu.vector_store %arg3[%c0_6, %c0_7], %7 {strides = array<i32>} : memref<8x128xf32, #tpu.memory_space<vmem>>, vector<8x128xf32>,
    return
  }
}

</mosaic_0001>

<llo_original>
// kernel: linear_relu.1
$region0: #{linear_relu.1}
  #allocation0 [shape = 'u32[]', space=smem, size = 0x4, offset = 0x4, fixed_abs, tag = 'smem constant byte address 0x4 - core index']
  #allocation1 [shape = 'u32[144,128]{1,0:T(1,128)}', space=vmem, size = 0x12000, scoped, tag = 'internal scratch']
  %s0 = inlined_call_operand.hbm [shape: f32[8,32], index: 0, kind: input, shape index: {}]
  %s1 = inlined_call_operand.hbm [shape: f32[32,128], index: 1, kind: input, shape index: {}]
  %s2 = inlined_call_operand.vmem [shape: f32[1,128], index: 2, kind: input, shape index: {}]
  %s3 = inlined_call_operand.hbm [shape: f32[8,128], index: 3, kind: output, shape index: {}]
  %s4 = sld [smem:[#allocation0]]
  $region30: #{linear_relu.1} parent=0
    _
  %s6 = ssub.s32 1, %s4
  %s7 = scalar_select 0, %s6, %s4
  $region1: #{linear_relu.1} parent=0
    #allocation2 [shape = 'u8[4096]{0}', space=vmem, size = 0x1000, scoped, tag = 'input window, operand 0, single buffered']
    #allocation3 [shape = 's32[1]{0}', space=sflag, size = 0x4, scoped, tag = 'scoped memory for linear_relu.1']
    #allocation4 [shape = 's32[1]{0}', space=sflag, size = 0x4, scoped, tag = 'scoped memory for linear_relu.1']
    #allocation5 [shape = 'u8[16384]{0}', space=vmem, size = 0x4000, scoped, tag = 'input window, operand 1, single buffered']
    #allocation6 [shape = 's32[1]{0}', space=sflag, size = 0x4, scoped, tag = 'scoped memory for linear_relu.1']
    #allocation7 [shape = 'u8[4096]{0}', space=vmem, size = 0x1000, scoped, tag = 'output window, operand 0, single buffered']
    %8 = vsyncpa [#allocation3], 0
    %9 = vsyncpa [#allocation6], 0
    %10 = vsyncpa [#allocation4], 0
    // Predicated region
    $region2: #{linear_relu.1} parent=1 // pred_check
      _
    $region3: #{linear_relu.1} parent=1 // pred_check_branch
      %12 = sbr.rel (0) target = $region5
    $region4: #{linear_relu.1} parent=1 // pred_region
      %s14 = ssub.s32 128, 128
      %15 = vsyncadd [#allocation3], %s14
      %s17 = sshll.u32 [#allocation2], 4
      %s18 = int_to_ptr.vmem [resolvable:$true] %s17
      %20 = dma.hbm_to_vmem [thread:$0]  %s0, 128, %s18, [#allocation3]
    $region5: #{linear_relu.1} parent=1 // pred_fallthru
      _
    // Predicated region
    $region6: #{linear_relu.1} parent=1 // pred_check
      _
    $region7: #{linear_relu.1} parent=1 // pred_check_branch
      %22 = sbr.rel (0) target = $region9
    $region8: #{linear_relu.1} parent=1 // pred_region
      %s24 = ssub.s32 512, 512
      %25 = vsyncadd [#allocation6], %s24
      %s26 = sshll.u32 [#allocation5], 4
      %s27 = int_to_ptr.vmem [resolvable:$true] %s26
      %32 = dma.hbm_to_vmem [thread:$0]  %s1, 512, %s27, [#allocation6], 128, 128, 8
    $region9: #{linear_relu.1} parent=1 // pred_fallthru
      _
    // Predicated region
    $region10: #{linear_relu.1} parent=1 // pred_check
      _
    $region11: #{linear_relu.1} parent=1 // pred_check_branch
      %34 = sbr.rel (0) target = $region13
    $region12: #{linear_relu.1} parent=1 // pred_region
      _
    $region13: #{linear_relu.1} parent=1 // pred_fallthru
      _
    // Predicated region
    $region14: #{linear_relu.1} parent=1 // pred_check
      _
    $region15: #{linear_relu.1} parent=1 // pred_check_branch
      %36 = sbr.rel (0) target = $region17
    $region16: #{linear_relu.1} parent=1 // pred_region
      %37 = dma.done [#allocation3], 128
    $region17: #{linear_relu.1} parent=1 // pred_fallthru
      _
    // Predicated region
    $region18: #{linear_relu.1} parent=1 // pred_check
      _
    $region19: #{linear_relu.1} parent=1 // pred_check_branch
      %39 = sbr.rel (0) target = $region21
    $region20: #{linear_relu.1} parent=1 // pred_region
      %40 = dma.done [#allocation6], 512
    $region21: #{linear_relu.1} parent=1 // pred_fallthru
      _
    %v41 = vld [vmem:[#allocation2] sm:$0xff]
    %v42 = vld [vmem:[#allocation5] sm:$0xff]
    %v43 = vld [vmem:[#allocation5 + $0x8] sm:$0xff]
    %v44 = vld [vmem:[#allocation5 + $0x10] sm:$0xff]
    %v45 = vld [vmem:[#allocation5 + $0x18] sm:$0xff]
    %v46 = vld [vmem:[%s2] sm:$0x1]
    %v48 = vlaneseq
    %v49 = vshrl.u32 %v48, 7
    %v50 = vsub.s32 0, %v49
    %v51 = vrot.slane %v46, %v50
    %vm53 = vcmask 261120
    %v55 = vsel %vm53, %v41, 0
    %57 = vmatprep.subr.mxu0 0.0
    %58 = vmatpush1.msra.mxu0 0.0
    %59 = vmatprep.subr.mxu0 0.0
    %60 = vmatpush1.msra.mxu0 0.0
    %61 = vmatprep.subr.mxu0 0.0
    %62 = vmatpush1.msra.mxu0 0.0
    %63 = vmatprep.subr.mxu0 0.0
    %64 = vmatpush1.msra.mxu0 0.0
    %65 = vmatprep.subr.mxu0 0.0
    %66 = vmatpush1.msra.mxu0 0.0
    %67 = vmatprep.subr.mxu0 0.0
    %68 = vmatpush1.msra.mxu0 0.0
    %69 = vmatprep.subr.mxu0 0.0
    %70 = vmatpush1.msra.mxu0 0.0
    %71 = vmatprep.subr.mxu0 0.0
    %72 = vmatpush1.msra.mxu0 0.0
    %73 = vmatprep.subr.mxu0 0.0
    %74 = vmatpush1.msra.mxu0 0.0
    %75 = vmatprep.subr.mxu0 0.0
    %76 = vmatpush1.msra.mxu0 0.0
    %77 = vmatprep.subr.mxu0 0.0
    %78 = vmatpush1.msra.mxu0 0.0
    %79 = vmatprep.subr.mxu0 0.0
    %80 = vmatpush1.msra.mxu0 0.0
    %81 = vmatprep.subr.mxu0 0.0
    %82 = vmatpush1.msra.mxu0 %v45
    %83 = vmatprep.subr.mxu0 0.0
    %84 = vmatpush1.msra.mxu0 %v44
    %85 = vmatprep.subr.mxu0 0.0
    %86 = vmatpush1.msra.mxu0 %v43
    %87 = vmatprep.subr.mxu0 0.0
    %88 = vmatpush1.msra.mxu0 %v42
    %89 = vmatprep.subr.mxu0 0.0
    %90 = vmatpush2.msra.mxu0 0.0
    %91 = vmatprep.subr.mxu0 0.0
    %92 = vmatpush2.msra.mxu0 0.0
    %93 = vmatprep.subr.mxu0 0.0
    %94 = vmatpush2.msra.mxu0 0.0
    %95 = vmatprep.subr.mxu0 0.0
    %96 = vmatpush2.msra.mxu0 0.0
    %97 = vmatprep.subr.mxu0 0.0
    %98 = vmatpush2.msra.mxu0 0.0
    %99 = vmatprep.subr.mxu0 0.0
    %100 = vmatpush2.msra.mxu0 0.0
    %101 = vmatprep.subr.mxu0 0.0
    %102 = vmatpush2.msra.mxu0 0.0
    %103 = vmatprep.subr.mxu0 0.0
    %104 = vmatpush2.msra.mxu0 0.0
    %105 = vmatprep.subr.mxu0 0.0
    %106 = vmatpush2.msra.mxu0 0.0
    %107 = vmatprep.subr.mxu0 0.0
    %108 = vmatpush2.msra.mxu0 0.0
    %109 = vmatprep.subr.mxu0 0.0
    %110 = vmatpush2.msra.mxu0 0.0
    %111 = vmatprep.subr.mxu0 0.0
    %112 = vmatpush2.msra.mxu0 0.0
    %113 = vmatprep.subr.mxu0 0.0
    %114 = vmatpush2.msra.mxu0 0.0
    %115 = vmatprep.subr.mxu0 0.0
    %116 = vmatpush2.msra.mxu0 0.0
    %117 = vmatprep.subr.mxu0 0.0
    %118 = vmatpush2.msra.mxu0 0.0
    %119 = vmatprep.subr.mxu0 0.0
    %120 = vmatpush2.msra.mxu0 0.0
    %121 = vmatprep.mubr.f32.mxu0 0.0
    %122 = vmatmul.mubr.f32.gmra.mxu0 %v55
    %v123 = vpop.f32.mrf.mxu0
    %v124 = vadd.f32 %v51, %v123
    %v125 = vpop.f32.mrf.mxu0
    %126 = vdwg.mxu0
    %v127 = vmax.f32 %v124, 0.0
    %128 = vst [vmem:[#allocation7] sm:$0xff] %v127
    // Predicated region
    $region22: #{linear_relu.1} parent=1 // pred_check
      _
    $region23: #{linear_relu.1} parent=1 // pred_check_branch
      %130 = sbr.rel (0) target = $region25
    $region24: #{linear_relu.1} parent=1 // pred_region
      %s132 = ssub.s32 128, 128
      %133 = vsyncadd [#allocation4], %s132
      %s135 = sshll.u32 [#allocation7], 4
      %s136 = int_to_ptr.vmem [resolvable:$true] %s135
      %138 = dma.vmem_to_hbm [thread:$0]  %s136, 128, %s3, [#allocation4]
    $region25: #{linear_relu.1} parent=1 // pred_fallthru
      _
    // Predicated region
    $region26: #{linear_relu.1} parent=1 // pred_check
      _
    $region27: #{linear_relu.1} parent=1 // pred_check_branch
      %140 = sbr.rel (0) target = $region29
    $region28: #{linear_relu.1} parent=1 // pred_region
      %141 = dma.done [#allocation4], 128
    $region29: #{linear_relu.1} parent=1 // pred_fallthru
      _
    %142 = vsyncpa [#allocation3], 1
    %143 = vsyncpa [#allocation6], 1
    %144 = vsyncpa [#allocation4], 1

</llo_original>
